<compile_context>
chip_gen: v5e
topology: v5e:2x2
jax: 0.10.0
libtpu: 0.0.40
codegen_flags: <defaults>
</compile_context>

<pallas_src>
import numpy as np
import jax
import jax.numpy as jnp
from jax.experimental import pallas as pl
from jax.experimental.pallas import tpu as pltpu


# ---------------------------------------------------------------------------
# Host-side construction of the pooling / upsampling operator matrices
# ---------------------------------------------------------------------------
def _adaptive_pool_matrix_1d(out_size: int, in_size: int) -> np.ndarray:
    """M[i, h] s.t. pooled[i] = sum_h M[i, h] * x[h]  (PyTorch AdaptiveAvgPool)."""
    M = np.zeros((out_size, in_size), dtype=np.float32)
    for i in range(out_size):
        start = (i * in_size) // out_size
        end = -((-(i + 1) * in_size) // out_size)  # ceil((i+1)*in/out)
        M[i, start:end] = 1.0 / float(end - start)
    return M


def _bilinear_matrix_1d(out_size: int, in_size: int) -> np.ndarray:
    """M[I, i] for bilinear upsample with align_corners=True."""
    M = np.zeros((out_size, in_size), dtype=np.float32)
    if in_size == 1:
        M[:, 0] = 1.0
        return M
    scale = (in_size - 1) / (out_size - 1) if out_size > 1 else 0.0
    for I in range(out_size):
        src = I * scale
        i0 = min(int(np.floor(src)), in_size - 1)
        i1 = min(i0 + 1, in_size - 1)
        frac = src - i0
        M[I, i0] += 1.0 - frac
        M[I, i1] += frac
    return M


def _spatial_operators(bin_size: int, H: int, W: int):
    """Returns poolT: (H*W, b*b), upT: (b*b, H*W) as numpy float32."""
    Ph = _adaptive_pool_matrix_1d(bin_size, H)   # (b, H)
    Pw = _adaptive_pool_matrix_1d(bin_size, W)   # (b, W)
    Uh = _bilinear_matrix_1d(H, bin_size)        # (H, b)
    Uw = _bilinear_matrix_1d(W, bin_size)        # (W, b)
    pool2d = np.kron(Ph, Pw)                     # (b*b, H*W)
    up2d = np.kron(Uh, Uw)                       # (H*W, b*b)
    return pool2d.T.copy(), up2d.T.copy()        # (HW, bb), (bb, HW)


# ---------------------------------------------------------------------------
# Per-generation tile / VMEM defaults (safe fallbacks; wrapper can override)
# ---------------------------------------------------------------------------
def _device_kind() -> str:
    try:
        return jax.devices()[0].device_kind.lower()
    except Exception:
        return ""


def _default_tile_hw() -> int:
    kind = _device_kind()
    if ("v7" in kind) or ("7x" in kind):
        return 512            # 64 MiB VMEM: keep (Cin+Ctot, T) out tiles modest
    return 1024               # v5e / v6e: 128 MiB VMEM allows larger lane tiles


def _default_vmem_limit() -> int:
    kind = _device_kind()
    if ("v7" in kind) or ("7x" in kind):
        return 56 * 1024 * 1024
    return 100 * 1024 * 1024


# ---------------------------------------------------------------------------
# Phase 1: adaptive avg pool (accumulated over HW tiles) + conv/BN/ReLU/mask
# ---------------------------------------------------------------------------
def psp_pool_kernel(x_ref, poolT_ref, w_ref, shift_ref, mask_ref,
                    y_ref, acc_ref):
    # x_ref:     (Cin, T_hw)   f32  current batch element, current HW tile
    # poolT_ref: (T_hw, BBp)   f32  concatenated (zero-padded) pool operators
    # w_ref:     (Ctot, Cin)   f32  stacked 1x1-conv weights, BN scale folded
    # shift_ref: (Ctot, 1)     f32  folded BN shift = beta - mean*scale
    # mask_ref:  (Ctot, BBp)   f32  block-diagonal branch selector (0 on pad)
    # y_ref:     (Ctot, BBp)   f32  output (written only at the last HW tile)
    # acc_ref:   (Cin, BBp)    f32  VMEM scratch accumulator
    t = pl.program_id(1)

    @pl.when(t == 0)
    def _():
        acc_ref[...] = jnp.zeros_like(acc_ref)

    acc_ref[...] += jnp.dot(x_ref[...], poolT_ref[...],
                            preferred_element_type=jnp.float32)

    @pl.when(t == pl.num_programs(1) - 1)
    def _():
        y = jnp.dot(w_ref[...], acc_ref[...],
                    preferred_element_type=jnp.float32)
        # BN shift + ReLU, THEN mask (must stay after ReLU for correctness).
        y_ref[...] = jnp.maximum(y + shift_ref[...], 0.0) * mask_ref[...]


# ---------------------------------------------------------------------------
# Phase 2: bilinear upsample per HW tile + identity pass-through of x
# ---------------------------------------------------------------------------
def psp_up_kernel(x_ref, y_ref, upT_ref, out_ref):
    # x_ref:   (Cin, T_hw)   f32
    # y_ref:   (Ctot, BBp)   f32  branch activations (post conv/BN/ReLU/mask)
    # upT_ref: (BBp, T_hw)   f32  stacked bilinear upsample operator tile
    # out_ref: (Cin+Ctot, T_hw) f32  concatenated [x | branch1..branch4] tile
    cin = x_ref.shape[0]
    out_ref[:cin, :] = x_ref[...]
    out_ref[cin:, :] = jnp.dot(y_ref[...], upT_ref[...],
                               preferred_element_type=jnp.float32)


# ---------------------------------------------------------------------------
# Wrapper
# ---------------------------------------------------------------------------
def psp_forward(x_nchw, params, bins=(1, 2, 3, 6), eps=1e-5, tile_hw=None):
    """PSP forward: (B, Cin, H, W) -> (B, Cin + len(bins)*Cout, H, W)."""
    B, Cin, H, W = x_nchw.shape
    HW = H * W
    Cout = params[0]["conv_w"].shape[0]
    nb = len(bins)
    Ctot = nb * Cout
    bbs = [b * b for b in bins]
    BB = int(sum(bbs))
    offs = np.cumsum([0] + bbs)
    BBp = ((BB + 63) // 64) * 64                 # 50 -> 64: lane-friendly pad

    # --- HW tile selection (128-aligned, per-generation default) ------------
    if tile_hw is None:
        tile_hw = _default_tile_hw()
    tile_hw = max(128, (int(tile_hw) // 128) * 128)
    hw_pad128 = ((HW + 127) // 128) * 128
    tile_hw = min(tile_hw, hw_pad128)
    # Pad HW to a multiple of the tile so every tile (loads and stores) is
    # full-width and lane-dense; padded columns are zero and stripped later.
    HW_pad = ((HW + tile_hw - 1) // tile_hw) * tile_hw
    n_hw = HW_pad // tile_hw
    vmem_limit = _default_vmem_limit()

    # --- concatenated, zero-padded spatial operators (host-side glue) -------
    poolT_np = np.zeros((HW_pad, BBp), dtype=np.float32)
    upT_np = np.zeros((BBp, HW_pad), dtype=np.float32)
    for j, b in enumerate(bins):
        pT, uT = _spatial_operators(b, H, W)     # (HW, bb), (bb, HW)
        poolT_np[:HW, offs[j]:offs[j + 1]] = pT
        upT_np[offs[j]:offs[j + 1], :HW] = uT

    # block-diagonal selector: branch j keeps only its own pooled columns
    # (also zeroes the BB pad columns, so relu(shift) there cannot leak).
    mask_np = np.zeros((Ctot, BBp), dtype=np.float32)
    for j in range(nb):
        mask_np[j * Cout:(j + 1) * Cout, offs[j]:offs[j + 1]] = 1.0

    poolT_all = jnp.asarray(poolT_np)            # (HW_pad, BBp) f32
    upT_all = jnp.asarray(upT_np)                # (BBp, HW_pad) f32
    mask = jnp.asarray(mask_np)                  # (Ctot, BBp)   f32

    # --- fold BN (inference mode) into conv weight / shift; stack branches --
    w_rows, shift_rows = [], []
    for p in params:
        scale = p["gamma"] / jnp.sqrt(p["var"] + eps)          # (Cout,)
        w_rows.append(p["conv_w"] * scale[:, None])            # fold scale
        shift_rows.append(p["beta"] - p["mean"] * scale)
    w_all = jnp.concatenate(w_rows, axis=0).astype(jnp.float32)        # (Ctot, Cin)
    shift_all = jnp.concatenate(shift_rows, axis=0).reshape(Ctot, 1)
    shift_all = shift_all.astype(jnp.float32)

    # --- pad x along HW (zeros; poolT pad rows are zero too) ----------------
    x_r = x_nchw.reshape(B, Cin, HW).astype(jnp.float32)
    if HW_pad != HW:
        x_r = jnp.pad(x_r, ((0, 0), (0, 0), (0, HW_pad - HW)))

    # ------------------------- phase 1: pool + conv/BN/ReLU -----------------
    y_small = pl.pallas_call(
        psp_pool_kernel,
        out_shape=jax.ShapeDtypeStruct((B, Ctot, BBp), jnp.float32),
        grid_spec=pltpu.PrefetchScalarGridSpec(
            num_scalar_prefetch=0,
            grid=(B, n_hw),
            in_specs=[
                pl.BlockSpec((None, Cin, tile_hw), lambda n, t: (n, 0, t)),
                pl.BlockSpec((tile_hw, BBp), lambda n, t: (t, 0)),
                pl.BlockSpec((Ctot, Cin), lambda n, t: (0, 0)),
                pl.BlockSpec((Ctot, 1), lambda n, t: (0, 0)),
                pl.BlockSpec((Ctot, BBp), lambda n, t: (0, 0)),
            ],
            out_specs=pl.BlockSpec((None, Ctot, BBp), lambda n, t: (n, 0, 0)),
            scratch_shapes=[pltpu.VMEM((Cin, BBp), jnp.float32)],
        ),
        compiler_params=pltpu.CompilerParams(
            dimension_semantics=("parallel", "arbitrary"),
            vmem_limit_bytes=vmem_limit,
        ),
    )(x_r, poolT_all, w_all, shift_all, mask)

    # ------------------- phase 2: upsample + concat pass-through ------------
    out_pad = pl.pallas_call(
        psp_up_kernel,
        out_shape=jax.ShapeDtypeStruct((B, Cin + Ctot, HW_pad), jnp.float32),
        grid_spec=pltpu.PrefetchScalarGridSpec(
            num_scalar_prefetch=0,
            grid=(B, n_hw),
            in_specs=[
                pl.BlockSpec((None, Cin, tile_hw), lambda n, t: (n, 0, t)),
                pl.BlockSpec((None, Ctot, BBp), lambda n, t: (n, 0, 0)),
                pl.BlockSpec((BBp, tile_hw), lambda n, t: (0, t)),
            ],
            out_specs=pl.BlockSpec((None, Cin + Ctot, tile_hw),
                                   lambda n, t: (n, 0, t)),
        ),
        compiler_params=pltpu.CompilerParams(
            dimension_semantics=("parallel", "parallel"),
            vmem_limit_bytes=vmem_limit,
        ),
    )(x_r, y_small, upT_all)

    out = out_pad[:, :, :HW].reshape(B, Cin + Ctot, H, W)
    return out


# ---------------------------------------------------------------------------
# Plain-JAX f32 reference (same PyTorch semantics) for correctness checking
# ---------------------------------------------------------------------------
def psp_module_ref(x_nchw, bin_size, p, eps=1e-5):
    B, Cin, H, W = x_nchw.shape
    Cout = p["conv_w"].shape[0]
    poolT, upT = _spatial_operators(bin_size, H, W)
    scale = p["gamma"] / jnp.sqrt(p["var"] + eps)
    shift = p["beta"] - p["mean"] * scale
    x_r = x_nchw.reshape(B, Cin, H * W)
    pooled = jnp.einsum("bcs,st->bct", x_r, jnp.asarray(poolT))
    y = jnp.einsum("oc,bct->bot", p["conv_w"], pooled)
    y = y * scale[None, :, None] + shift[None, :, None]
    y = jnp.maximum(y, 0.0)
    out = jnp.einsum("bot,ts->bos", y, jnp.asarray(upT))
    return out.reshape(B, Cout, H, W)


def psp_forward_ref(x_nchw, params, bins=(1, 2, 3, 6)):
    branches = [psp_module_ref(x_nchw, b, p) for b, p in zip(bins, params)]
    return jnp.concatenate([x_nchw] + branches, axis=1)


# ---------------------------------------------------------------------------
if __name__ == "__main__":
    key = jax.random.PRNGKey(0)
    B, Cin, Cout, H, W = 2, 8, 8, 16, 16     # small, 8/128-friendly shapes
    bins = (1, 2, 3, 6)

    k_x, k_p = jax.random.split(key)
    x = jax.random.normal(k_x, (B, Cin, H, W), dtype=jnp.float32)

    params = []
    for i, _ in enumerate(bins):
        kw, kg, kb, km, kv = jax.random.split(jax.random.fold_in(k_p, i), 5)
        params.append(dict(
            conv_w=0.2 * jax.random.normal(kw, (Cout, Cin), jnp.float32),  # 1x1 conv, no bias
            gamma=1.0 + 0.1 * jax.random.normal(kg, (Cout,), jnp.float32),
            beta=0.1 * jax.random.normal(kb, (Cout,), jnp.float32),
            mean=0.1 * jax.random.normal(km, (Cout,), jnp.float32),
            var=1.0 + 0.5 * jax.random.uniform(kv, (Cout,), jnp.float32),
        ))

    # tile_hw=128 -> HW_pad=256, 2 HW tiles: exercises the accumulator path.
    out = psp_forward(x, params, bins, tile_hw=128)
    out = jax.block_until_ready(out)
    assert out.shape == (B, Cin + len(bins) * Cout, H, W), out.shape

    ref = jax.block_until_ready(psp_forward_ref(x, params, bins))
    np.testing.assert_allclose(np.asarray(out), np.asarray(ref),
                               rtol=2e-2, atol=2e-2)

    print("KERNEL_OK")
</pallas_src>

<mosaic_0001>
module attributes {stable_mosaic.version = 11 : i64} {
  func.func @psp_pool_kernel(%arg0: i32, %arg1: i32, %arg2: memref<1x8x128xf32, #tpu.memory_space<vmem>>, %arg3: memref<128x64xf32, #tpu.memory_space<vmem>>, %arg4: memref<32x8xf32, #tpu.memory_space<vmem>>, %arg5: memref<32x1xf32, #tpu.memory_space<vmem>>, %arg6: memref<32x64xf32, #tpu.memory_space<vmem>>, %arg7: memref<1x32x64xf32, #tpu.memory_space<vmem>>, %arg8: memref<8x64xf32, #tpu.memory_space<vmem>>) attributes {dimension_semantics = [#tpu.dimension_semantics<parallel>, #tpu.dimension_semantics<arbitrary>], iteration_bounds = array<i64: 2, 2>, scalar_prefetch = 0 : i64, scratch_operands = 1 : i64, tpu.core_type = #tpu.core_type<tc>, window_params = [{transform_indices = @transform_0, window_bounds = array<i64: 1, 8, 128>}, {transform_indices = @transform_1, window_bounds = array<i64: 128, 64>}, {pipeline_mode = #tpu.pipeline_mode<synchronous>, transform_indices = @transform_2, window_bounds = array<i64: 32, 8>}, {pipeline_mode = #tpu.pipeline_mode<synchronous>, transform_indices = @transform_3, window_bounds = array<i64: 32, 1>}, {pipeline_mode = #tpu.pipeline_mode<synchronous>, transform_indices = @transform_4, window_bounds = array<i64: 32, 64>}, {transform_indices = @transform_5, window_bounds = array<i64: 1, 32, 64>}]} {
    %c0_i32 = arith.constant 0 : i32
    %0 = arith.cmpi eq, %arg1, %c0_i32 : i32
    %1 = arith.extui %0 : i1 to i32
    %c0_i32_0 = arith.constant 0 : i32
    %2 = arith.cmpi ne, %1, %c0_i32_0 : i32
    scf.if %2 {
      %cst_10 = arith.constant 0.000000e+00 : f32
      %13 = vector.broadcast %cst_10 : f32 to vector<8x64xf32>
      %c0_11 = arith.constant 0 : index
      %c0_12 = arith.constant 0 : index
      %14 = vector.load %arg8[%c0_11, %c0_12] : memref<8x64xf32, #tpu.memory_space<vmem>>, vector<8x64xf32>
      tpu.vector_store %arg8[%c0_11, %c0_12], %13 {strides = array<i32>} : memref<8x64xf32, #tpu.memory_space<vmem>>, vector<8x64xf32>,
    } else {
    }
    %c0 = arith.constant 0 : index
    %c0_1 = arith.constant 0 : index
    %3 = vector.load %arg8[%c0, %c0_1] : memref<8x64xf32, #tpu.memory_space<vmem>>, vector<8x64xf32>
    %c0_2 = arith.constant 0 : index
    %c0_3 = arith.constant 0 : index
    %c0_4 = arith.constant 0 : index
    %4 = vector.load %arg2[%c0_2, %c0_3, %c0_4] : memref<1x8x128xf32, #tpu.memory_space<vmem>>, vector<1x8x128xf32>
    %5 = vector.shape_cast %4 : vector<1x8x128xf32> to vector<8x128xf32>
    %c0_5 = arith.constant 0 : index
    %c0_6 = arith.constant 0 : index
    %6 = vector.load %arg3[%c0_5, %c0_6] : memref<128x64xf32, #tpu.memory_space<vmem>>, vector<128x64xf32>
    %cst = arith.constant dense<0.000000e+00> : vector<8x64xf32>
    %7 = tpu.matmul %5, %6, %cst {dimension_numbers = #tpu.dot_dimension_numbers<[1], [0], [0], [1], [0, 0, 1, 1], [], []>} : vector<8x128xf32>, vector<128x64xf32>, vector<8x64xf32> -> vector<8x64xf32>
    %8 = arith.addf %3, %7 : vector<8x64xf32>
    %c0_7 = arith.constant 0 : index
    %c0_8 = arith.constant 0 : index
    %9 = vector.load %arg8[%c0_7, %c0_8] : memref<8x64xf32, #tpu.memory_space<vmem>>, vector<8x64xf32>
    tpu.vector_store %arg8[%c0_7, %c0_8], %8 {strides = array<i32>} : memref<8x64xf32, #tpu.memory_space<vmem>>, vector<8x64xf32>,
    %c1_i32 = arith.constant 1 : i32
    %10 = arith.cmpi eq, %arg1, %c1_i32 : i32
    %11 = arith.extui %10 : i1 to i32
    %c0_i32_9 = arith.constant 0 : i32
    %12 = arith.cmpi ne, %11, %c0_i32_9 : i32
    scf.if %12 {
      %c0_10 = arith.constant 0 : index
      %c0_11 = arith.constant 0 : index
      %13 = vector.load %arg4[%c0_10, %c0_11] : memref<32x8xf32, #tpu.memory_space<vmem>>, vector<32x8xf32>
      %c0_12 = arith.constant 0 : index
      %c0_13 = arith.constant 0 : index
      %14 = vector.load %arg8[%c0_12, %c0_13] : memref<8x64xf32, #tpu.memory_space<vmem>>, vector<8x64xf32>
      %cst_14 = arith.constant dense<0.000000e+00> : vector<32x64xf32>
      %15 = tpu.matmul %13, %14, %cst_14 {dimension_numbers = #tpu.dot_dimension_numbers<[1], [0], [0], [1], [0, 0, 1, 1], [], []>} : vector<32x8xf32>, vector<8x64xf32>, vector<32x64xf32> -> vector<32x64xf32>
      %c0_15 = arith.constant 0 : index
      %c0_16 = arith.constant 0 : index
      %16 = vector.load %arg5[%c0_15, %c0_16] : memref<32x1xf32, #tpu.memory_space<vmem>>, vector<32x1xf32>
      %17 = vector.broadcast %16 : vector<32x1xf32> to vector<32x64xf32>
      %18 = arith.addf %15, %17 : vector<32x64xf32>
      %cst_17 = arith.constant 0.000000e+00 : f32
      %19 = vector.broadcast %cst_17 : f32 to vector<32x64xf32>
      %20 = arith.maximumf %18, %19 : vector<32x64xf32>
      %c0_18 = arith.constant 0 : index
      %c0_19 = arith.constant 0 : index
      %21 = vector.load %arg6[%c0_18, %c0_19] : memref<32x64xf32, #tpu.memory_space<vmem>>, vector<32x64xf32>
      %22 = arith.mulf %20, %21 : vector<32x64xf32>
      %c0_20 = arith.constant 0 : index
      %c0_21 = arith.constant 0 : index
      %c0_22 = arith.constant 0 : index
      %23 = vector.load %arg7[%c0_20, %c0_21, %c0_22] : memref<1x32x64xf32, #tpu.memory_space<vmem>>, vector<1x32x64xf32>
      %24 = vector.shape_cast %23 : vector<1x32x64xf32> to vector<32x64xf32>
      %25 = vector.shape_cast %22 : vector<32x64xf32> to vector<1x32x64xf32>
      tpu.vector_store %arg7[%c0_20, %c0_21, %c0_22], %25 {strides = array<i32>} : memref<1x32x64xf32, #tpu.memory_space<vmem>>, vector<1x32x64xf32>,
    } else {
    }
    return
  }
  func.func @transform_0(%arg0: i32, %arg1: i32) -> (i32, i32, i32) {
    %c0_i32 = arith.constant 0 : i32
    %c0_i32_0 = arith.constant 0 : i32
    return %arg0, %c0_i32, %arg1 : i32, i32, i32
  }
  func.func @transform_1(%arg0: i32, %arg1: i32) -> (i32, i32) {
    %c0_i32 = arith.constant 0 : i32
    %c0_i32_0 = arith.constant 0 : i32
    return %arg1, %c0_i32 : i32, i32
  }
  func.func @transform_2(%arg0: i32, %arg1: i32) -> (i32, i32) {
    %c0_i32 = arith.constant 0 : i32
    %c0_i32_0 = arith.constant 0 : i32
    %c0_i32_1 = arith.constant 0 : i32
    return %c0_i32, %c0_i32_0 : i32, i32
  }
  func.func @transform_3(%arg0: i32, %arg1: i32) -> (i32, i32) {
    %c0_i32 = arith.constant 0 : i32
    %c0_i32_0 = arith.constant 0 : i32
    %c0_i32_1 = arith.constant 0 : i32
    return %c0_i32, %c0_i32_0 : i32, i32
  }
  func.func @transform_4(%arg0: i32, %arg1: i32) -> (i32, i32) {
    %c0_i32 = arith.constant 0 : i32
    %c0_i32_0 = arith.constant 0 : i32
    %c0_i32_1 = arith.constant 0 : i32
    return %c0_i32, %c0_i32_0 : i32, i32
  }
  func.func @transform_5(%arg0: i32, %arg1: i32) -> (i32, i32, i32) {
    %c0_i32 = arith.constant 0 : i32
    %c0_i32_0 = arith.constant 0 : i32
    %c0_i32_1 = arith.constant 0 : i32
    return %arg0, %c0_i32, %c0_i32_0 : i32, i32, i32
  }
}

</mosaic_0001>

<llo_original>
// kernel: tpu_custom_call.1
$region0: #{tpu_custom_call.1}
  #allocation0 [shape = 'u32[]', space=smem, size = 0x4, offset = 0x4, fixed_abs, tag = 'smem constant byte address 0x4 - core index']
  #allocation1 [shape = 'u32[72,128]{1,0:T(1,128)}', space=vmem, size = 0x9000, scoped, tag = 'internal scratch']
  #allocation2 [shape = 'f32[8,64]{1,0:T(8,128)}', space=vmem, size = 0x1000, scoped, tag = 'scratch operand']
  %s0 = inlined_call_operand.vmem [shape: f32[2,8,256], index: 0, kind: input, shape index: {}]
  %s1 = inlined_call_operand.vmem [shape: f32[256,64], index: 1, kind: input, shape index: {}]
  %s2 = inlined_call_operand.vmem [shape: f32[32,8], index: 2, kind: input, shape index: {}]
  %s3 = inlined_call_operand.vmem [shape: f32[32,1], index: 3, kind: input, shape index: {}]
  %s4 = inlined_call_operand.vmem [shape: f32[32,64], index: 4, kind: input, shape index: {}]
  %s5 = inlined_call_operand.hbm [shape: f32[2,32,64], index: 5, kind: output, shape index: {}]
  %s6 = sld [smem:[#allocation0]]
  $region61: #{tpu_custom_call.1} parent=0
    _
  %s8 = ssub.s32 1, %s6
  %s9 = scalar_select 0, %s8, %s6
  $region1: #{tpu_custom_call.1} parent=0
    #allocation3 [shape = 'u8[32768]{0}', space=vmem, size = 0x8000, scoped, tag = 'output window, operand 0']
    #allocation4 [shape = 's32[2]{0}', space=sflag, size = 0x8, scoped, tag = 'scoped memory for tpu_custom_call.1']
    %10 = vsyncpa [#allocation4], 0
    %s11 = scalar_lea.sflag [#allocation4], 1
    %12 = vsyncpa %s11, 0
    loop: start=0, step=1, limit=6
    $region2: #{tpu_custom_call.1} parent=1 // loop_pre_header
      _
    $region3: #{tpu_custom_call.1} parent=1 // loop_header
      %s14 = sphi 0, %s18
      %p15 = scmp.ge.s32.totalorder %s14, 6
      %s21 = sphi 0, %s33
      %s22 = sphi 0, %s29
      %s23 = sphi 0, %s21
      %s24 = sphi 0, %s22
      %s25 = sphi 0, %s23
      %s26 = sphi 0, %s24
      %s38 = sphi 0, %s40
      %s41 = sphi 0, %s38
      %s42 = sphi 0, %s41
      %s58 = sphi 0, %s42
      %s64 = sphi 0, %s66
      %s67 = sphi 0, %s64
      %s68 = sphi 0, %s67
      %s84 = sphi 0, %s68
      %s88 = sphi 0, %s88
      %s90 = sphi 0, %s88
      %s91 = sphi 0, %s90
      %s105 = sphi 0, %s91
      %s109 = sphi 0, %s109
      %s111 = sphi 0, %s109
      %s112 = sphi 0, %s111
      %s126 = sphi 0, %s112
      %s130 = sphi 0, %s130
      %s132 = sphi 0, %s130
      %s133 = sphi 0, %s132
      %s147 = sphi 0, %s133
      %s153 = sphi 0, %s155
      %s156 = sphi 0, %s153
      %s157 = sphi 0, %s156
      %s173 = sphi 0, %s157
    $region4: #{tpu_custom_call.1} parent=1 // loop_header_branch
      %17 = sbr.rel (%p15) target = $region8
    $region5: #{tpu_custom_call.1} parent=1 // loop_body
      %s19 = ssub.s32 %s14, 1
      %s20 = ssub.s32 %s14, 2
      %s27 = sadd.s32 1, %s22
      %p28 = scmp.ge.s32.totalorder %s27, 2
      %s29 = scalar_select %p28, 0, %s27
      %s30 = sadd.s32 1, %s21
      %s31 = scalar_select %p28, %s30, %s21
      %p32 = scmp.ge.s32.totalorder %s31, 2
      %s33 = scalar_select %p32, 0, %s31
      %s34 = ssub.s32 %s21, %s33
      %s35 = ssub.s32 %s22, %s29
      %s36 = sor.u32 %s34, %s35
      %p37 = scmp.eq.s32.totalorder %s36, 0
      %s39 = sadd.s32 %s38, 1
      %s40 = scalar_select %p37, %s38, %s39
      %p43 = pneg %p37
      %p44 = scmp.eq.s32.totalorder %s14, 3
      %p45 = por %p43, %p44
      %p46 = scmp.ne.s32.totalorder %s38, %s41
      %p47 = scmp.eq.s32.totalorder %s14, 0
      %p48 = por %p46, %p47
      %p49 = scmp.ne.s32.totalorder %s38, %s41
      %p50 = scmp.eq.s32.totalorder %s19, 3
      %p51 = por %p49, %p50
      %p52 = scmp.ne.s32.totalorder %s41, %s42
      %p53 = scmp.eq.s32.totalorder %s19, 0
      %p54 = por %p52, %p53
      %p55 = scmp.ne.s32.totalorder %s41, %s42
      %p56 = scmp.eq.s32.totalorder %s20, 3
      %p57 = por %p55, %p56
      %p59 = scmp.ne.s32.totalorder %s42, %s58
      %p60 = scmp.eq.s32.totalorder %s20, 0
      %p61 = por %p59, %p60
      %s62 = ssub.s32 %s22, %s29
      %p63 = scmp.eq.s32.totalorder %s62, 0
      %s65 = sadd.s32 %s64, 1
      %s66 = scalar_select %p63, %s64, %s65
      %p69 = pneg %p63
      %p70 = scmp.eq.s32.totalorder %s14, 3
      %p71 = por %p69, %p70
      %p72 = scmp.ne.s32.totalorder %s64, %s67
      %p73 = scmp.eq.s32.totalorder %s14, 0
      %p74 = por %p72, %p73
      %p75 = scmp.ne.s32.totalorder %s64, %s67
      %p76 = scmp.eq.s32.totalorder %s19, 3
      %p77 = por %p75, %p76
      %p78 = scmp.ne.s32.totalorder %s67, %s68
      %p79 = scmp.eq.s32.totalorder %s19, 0
      %p80 = por %p78, %p79
      %p81 = scmp.ne.s32.totalorder %s67, %s68
      %p82 = scmp.eq.s32.totalorder %s20, 3
      %p83 = por %p81, %p82
      %p85 = scmp.ne.s32.totalorder %s68, %s84
      %p86 = scmp.eq.s32.totalorder %s20, 0
      %p87 = por %p85, %p86
      %s89 = sadd.s32 %s88, 1
      %p92 = scmp.eq.s32.totalorder %s14, 3
      %p93 = scmp.ne.s32.totalorder %s88, %s90
      %p94 = scmp.eq.s32.totalorder %s14, 0
      %p95 = por %p93, %p94
      %p96 = scmp.ne.s32.totalorder %s88, %s90
      %p97 = scmp.eq.s32.totalorder %s19, 3
      %p98 = por %p96, %p97
      %p99 = scmp.ne.s32.totalorder %s90, %s91
      %p100 = scmp.eq.s32.totalorder %s19, 0
      %p101 = por %p99, %p100
      %p102 = scmp.ne.s32.totalorder %s90, %s91
      %p103 = scmp.eq.s32.totalorder %s20, 3
      %p104 = por %p102, %p103
      %p106 = scmp.ne.s32.totalorder %s91, %s105
      %p107 = scmp.eq.s32.totalorder %s20, 0
      %p108 = por %p106, %p107
      %s110 = sadd.s32 %s109, 1
      %p113 = scmp.eq.s32.totalorder %s14, 3
      %p114 = scmp.ne.s32.totalorder %s109, %s111
      %p115 = scmp.eq.s32.totalorder %s14, 0
      %p116 = por %p114, %p115
      %p117 = scmp.ne.s32.totalorder %s109, %s111
      %p118 = scmp.eq.s32.totalorder %s19, 3
      %p119 = por %p117, %p118
      %p120 = scmp.ne.s32.totalorder %s111, %s112
      %p121 = scmp.eq.s32.totalorder %s19, 0
      %p122 = por %p120, %p121
      %p123 = scmp.ne.s32.totalorder %s111, %s112
      %p124 = scmp.eq.s32.totalorder %s20, 3
      %p125 = por %p123, %p124
      %p127 = scmp.ne.s32.totalorder %s112, %s126
      %p128 = scmp.eq.s32.totalorder %s20, 0
      %p129 = por %p127, %p128
      %s131 = sadd.s32 %s130, 1
      %p134 = scmp.eq.s32.totalorder %s14, 3
      %p135 = scmp.ne.s32.totalorder %s130, %s132
      %p136 = scmp.eq.s32.totalorder %s14, 0
      %p137 = por %p135, %p136
      %p138 = scmp.ne.s32.totalorder %s130, %s132
      %p139 = scmp.eq.s32.totalorder %s19, 3
      %p140 = por %p138, %p139
      %p141 = scmp.ne.s32.totalorder %s132, %s133
      %p142 = scmp.eq.s32.totalorder %s19, 0
      %p143 = por %p141, %p142
      %p144 = scmp.ne.s32.totalorder %s132, %s133
      %p145 = scmp.eq.s32.totalorder %s20, 3
      %p146 = por %p144, %p145
      %p148 = scmp.ne.s32.totalorder %s133, %s147
      %p149 = scmp.eq.s32.totalorder %s20, 0
      %p150 = por %p148, %p149
      %s151 = ssub.s32 %s21, %s33
      %p152 = scmp.eq.s32.totalorder %s151, 0
      %s154 = sadd.s32 %s153, 1
      %s155 = scalar_select %p152, %s153, %s154
      %p158 = pneg %p152
      %p159 = scmp.eq.s32.totalorder %s14, 3
      %p160 = por %p158, %p159
      %p161 = scmp.ne.s32.totalorder %s153, %s156
      %p162 = scmp.eq.s32.totalorder %s14, 0
      %p163 = por %p161, %p162
      %p164 = scmp.ne.s32.totalorder %s153, %s156
      %p165 = scmp.eq.s32.totalorder %s19, 3
      %p166 = por %p164, %p165
      %p167 = scmp.ne.s32.totalorder %s156, %s157
      %p168 = scmp.eq.s32.totalorder %s19, 0
      %p169 = por %p167, %p168
      %p170 = scmp.ne.s32.totalorder %s156, %s157
      %p171 = scmp.eq.s32.totalorder %s20, 3
      %p172 = por %p170, %p171
      %p174 = scmp.ne.s32.totalorder %s157, %s173
      %p175 = scmp.eq.s32.totalorder %s20, 0
      %p176 = por %p174, %p175
      %p177 = scmp.le.s32.totalorder 1, %s14
      %p178 = scmp.lt.s32.totalorder %s14, 5
      %p179 = pnand %p177, %p178
      %p180 = pneg %p179
      // Predicated region
      $region9: #{tpu_custom_call.1} parent=5 // pred_check
        _
      $region10: #{tpu_custom_call.1} parent=5 // pred_check_branch
        %182 = sbr.rel (%p179) target = $region12
      $region11: #{tpu_custom_call.1} parent=5 // pred_region
        %s183 = ssub.s32 %s14, 1
        // Predicated region
        $region13: #{tpu_custom_call.1} parent=11 // pred_check
          %p184 = pneg %p101
        $region14: #{tpu_custom_call.1} parent=11 // pred_check_branch
          %186 = sbr.rel (%p184) target = $region16
        $region15: #{tpu_custom_call.1} parent=11 // pred_region
          _
        $region16: #{tpu_custom_call.1} parent=11 // pred_fallthru
          _
        // Predicated region
        $region17: #{tpu_custom_call.1} parent=11 // pred_check
          %p187 = pneg %p122
        $region18: #{tpu_custom_call.1} parent=11 // pred_check_branch
          %189 = sbr.rel (%p187) target = $region20
        $region19: #{tpu_custom_call.1} parent=11 // pred_region
          _
        $region20: #{tpu_custom_call.1} parent=11 // pred_fallthru
          _
        // Predicated region
        $region21: #{tpu_custom_call.1} parent=11 // pred_check
          %p190 = pneg %p143
        $region22: #{tpu_custom_call.1} parent=11 // pred_check_branch
          %192 = sbr.rel (%p190) target = $region24
        $region23: #{tpu_custom_call.1} parent=11 // pred_region
          _
        $region24: #{tpu_custom_call.1} parent=11 // pred_fallthru
          _
      $region12: #{tpu_custom_call.1} parent=5 // pred_fallthru
        _
      %p193 = scmp.lt.s32.totalorder %s14, 4
      // Predicated region
      $region25: #{tpu_custom_call.1} parent=5 // pred_check
        %p194 = pneg %p193
      $region26: #{tpu_custom_call.1} parent=5 // pred_check_branch
        %196 = sbr.rel (%p194) target = $region28
      $region27: #{tpu_custom_call.1} parent=5 // pred_region
        // Predicated region
        $region29: #{tpu_custom_call.1} parent=27 // pred_check
          %p197 = pneg %p48
        $region30: #{tpu_custom_call.1} parent=27 // pred_check_branch
          %199 = sbr.rel (%p197) target = $region32
        $region31: #{tpu_custom_call.1} parent=27 // pred_region
          %p200 = scmp.lt.s32.totalorder %s21, 1
          %s201 = scalar_select %p200, %s21, 1
          %p202 = scmp.lt.s32.totalorder %s22, 1
          %s203 = scalar_select %p202, %s22, 1
          %s204 = smul.addr %s201, 2
          %s205 = sadd.s32 %s203, %s204
          %s206 = smul.addr %s205, 8
          %s207 = scalar_lea.vmem %s0, %s206
        $region32: #{tpu_custom_call.1} parent=27 // pred_fallthru
          _
        // Predicated region
        $region33: #{tpu_custom_call.1} parent=27 // pred_check
          %p208 = pneg %p74
        $region34: #{tpu_custom_call.1} parent=27 // pred_check_branch
          %210 = sbr.rel (%p208) target = $region36
        $region35: #{tpu_custom_call.1} parent=27 // pred_region
          %s211 = smul.u32 16, %s22
          %p212 = scmp.lt.s32.totalorder %s211, 31
          %s213 = scalar_select %p212, %s211, 31
          %s214 = smul.addr %s213, 8
          %s215 = scalar_lea.vmem %s1, %s214
          %s216 = smul.u32 16, %s22
        $region36: #{tpu_custom_call.1} parent=27 // pred_fallthru
          _
      $region28: #{tpu_custom_call.1} parent=5 // pred_fallthru
        _
      %p217 = scmp.le.s32.totalorder 1, %s14
      %p218 = scmp.lt.s32.totalorder %s14, 5
      %p219 = pnand %p217, %p218
      %p220 = pneg %p219
      // Predicated region
      $region37: #{tpu_custom_call.1} parent=5 // pred_check
        _
      $region38: #{tpu_custom_call.1} parent=5 // pred_check_branch
        %222 = sbr.rel (%p219) target = $region40
      $region39: #{tpu_custom_call.1} parent=5 // pred_region
        %s223 = ssub.s32 %s14, 1
        %p224 = scmp.lt.s32.totalorder %s23, 1
        %s225 = scalar_select %p224, %s23, 1
        %p226 = scmp.lt.s32.totalorder %s24, 1
        %s227 = scalar_select %p226, %s24, 1
        %s228 = smul.addr %s225, 2
        %s229 = sadd.s32 %s227, %s228
        %s230 = smul.addr %s229, 8
        %s231 = scalar_lea.vmem %s0, %s230
        %p232 = pneg %p54
        %p233 = pneg %p51
        %s234 = smul.u32 16, %s24
        %p235 = scmp.lt.s32.totalorder %s234, 31
        %s236 = scalar_select %p235, %s234, 31
        %s237 = smul.addr %s236, 8
        %s238 = scalar_lea.vmem %s1, %s237
        %p239 = pneg %p80
        %p240 = pneg %p77
        %p241 = pneg %p101
        %p242 = pneg %p98
        %p243 = pneg %p122
        %p244 = pneg %p119
        %p245 = pneg %p143
        %p246 = pneg %p140
        %p247 = pneg %p169
        %p248 = pneg %p166
        %s249 = sand.u32 %s156, 1
        %s250 = scalar_lea.sflag [#allocation4], %s249
        %s251 = sand.u32 %s156, 1
        %s252 = smul.addr %s251, 32
        %s253 = scalar_lea.vmem [#allocation3], %s252
        %p254 = scmp.lt.s32.totalorder %s23, 1
        %s255 = scalar_select %p254, %s23, 1
        %p256 = scmp.lt.s32.totalorder %s24, 1
        %s257 = scalar_select %p256, %s24, 1
        %s258 = smul.addr %s255, 2
        %s259 = sadd.s32 %s257, %s258
        %s260 = smul.addr %s259, 8
        %s261 = scalar_lea.vmem %s0, %s260
        %s262 = smul.u32 16, %s24
        %p263 = scmp.lt.s32.totalorder %s262, 31
        %s264 = scalar_select %p263, %s262, 31
        %s265 = smul.addr %s264, 8
        %s266 = scalar_lea.vmem %s1, %s265
        %s267 = smul.u32 16, %s24
        %p268 = scmp.eq.s32.totalorder %s24, 0
        // Predicated region
        $region41: #{tpu_custom_call.1} parent=39 // pred_check
          %p269 = pneg %p268
        $region42: #{tpu_custom_call.1} parent=39 // pred_check_branch
          %271 = sbr.rel (%p269) target = $region44
        $region43: #{tpu_custom_call.1} parent=39 // pred_region
          %vm272 = vcmask 523264
          %273 = vst.msk [vmem:[#allocation2] sm:$0xff] %vm272, 0.0
        $region44: #{tpu_custom_call.1} parent=39 // pred_fallthru
          _
        %v274 = vld [vmem:[#allocation2] sm:$0xff]
        %v275 = vld [vmem:[%s261] sm:$0xff]
        %v276 = vld [vmem:[%s266] sm:$0xff]
        %v277 = vld [vmem:[%s266 + $0x8] sm:$0xff]
        %v278 = vld [vmem:[%s266 + $0x10] sm:$0xff]
        %v279 = vld [vmem:[%s266 + $0x18] sm:$0xff]
        %v280 = vld [vmem:[%s266 + $0x20] sm:$0xff]
        %v281 = vld [vmem:[%s266 + $0x28] sm:$0xff]
        %v282 = vld [vmem:[%s266 + $0x30] sm:$0xff]
        %v283 = vld [vmem:[%s266 + $0x38] sm:$0xff]
        %v284 = vld [vmem:[%s266 + $0x40] sm:$0xff]
        %v285 = vld [vmem:[%s266 + $0x48] sm:$0xff]
        %v286 = vld [vmem:[%s266 + $0x50] sm:$0xff]
        %v287 = vld [vmem:[%s266 + $0x58] sm:$0xff]
        %v288 = vld [vmem:[%s266 + $0x60] sm:$0xff]
        %v289 = vld [vmem:[%s266 + $0x68] sm:$0xff]
        %v290 = vld [vmem:[%s266 + $0x70] sm:$0xff]
        %v291 = vld [vmem:[%s266 + $0x78] sm:$0xff]
        %292 = vmatpush.msra.mxu0 %v291
        %293 = vmatpush.msra.mxu0 %v290
        %294 = vmatpush.msra.mxu0 %v289
        %295 = vmatpush.msra.mxu0 %v288
        %296 = vmatpush.msra.mxu0 %v287
        %297 = vmatpush.msra.mxu0 %v286
        %298 = vmatpush.msra.mxu0 %v285
        %299 = vmatpush.msra.mxu0 %v284
        %300 = vmatpush.msra.mxu0 %v283
        %301 = vmatpush.msra.mxu0 %v282
        %302 = vmatpush.msra.mxu0 %v281
        %303 = vmatpush.msra.mxu0 %v280
        %304 = vmatpush.msra.mxu0 %v279
        %305 = vmatpush.msra.mxu0 %v278
        %306 = vmatpush.msra.mxu0 %v277
        %307 = vmatpush.msra.mxu0 %v276
        %308 = vmatmul.f32.gmra.mxu0 %v275
        %v309 = vpop.f32.mrf.mxu0
        %v310 = vadd.f32 0.0, %v309
        %311 = vdwg.mxu0
        %v312 = vadd.f32 %v274, %v310
        %vm313 = vcmask 523264
        %314 = vst.msk [vmem:[#allocation2] sm:$0xff] %vm313, %v312
        %p315 = scmp.eq.s32.totalorder %s24, 1
        // Predicated region
        $region45: #{tpu_custom_call.1} parent=39 // pred_check
          %p316 = pneg %p315
        $region46: #{tpu_custom_call.1} parent=39 // pred_check_branch
          %318 = sbr.rel (%p316) target = $region48
        $region47: #{tpu_custom_call.1} parent=39 // pred_region
          %v319 = vld [vmem:[%s2] sm:$0xff]
          %v320 = vld [vmem:[%s2 + $0x8] sm:$0xff]
          %v321 = vld [vmem:[%s2 + $0x10] sm:$0xff]
          %v322 = vld [vmem:[%s2 + $0x18] sm:$0xff]
          %v323 = vld [vmem:[#allocation2] sm:$0xff]
          %v324 = vld [vmem:[%s3] sm:$0xff]
          %v325 = vld [vmem:[%s3 + $0x8] sm:$0xff]
          %v326 = vld [vmem:[%s3 + $0x10] sm:$0xff]
          %v327 = vld [vmem:[%s3 + $0x18] sm:$0xff]
          %329 = vset.pattern.permute.xlu0 0
          %330 = vperm.xlu0 %329, %v324
          %v331 = vpop.permute.xlu0 %330
          %334 = vset.pattern.permute.xlu0 0
          %335 = vperm.xlu0 %334, %v325
          %v336 = vpop.permute.xlu0 %335
          %339 = vset.pattern.permute.xlu0 0
          %340 = vperm.xlu0 %339, %v326
          %v341 = vpop.permute.xlu0 %340
          %344 = vset.pattern.permute.xlu0 0
          %345 = vperm.xlu0 %344, %v327
          %v346 = vpop.permute.xlu0 %345
          %vm348 = vcmask 64512
          %v350 = vsel %vm348, %v319, 0
          %v353 = vsel %vm348, %v320, 0
          %v356 = vsel %vm348, %v321, 0
          %v359 = vsel %vm348, %v322, 0
          %361 = vmatpush.msra.mxu0 0.0
          %362 = vmatpush.msra.mxu0 0.0
          %363 = vmatpush.msra.mxu0 0.0
          %364 = vmatpush.msra.mxu0 0.0
          %365 = vmatpush.msra.mxu0 0.0
          %366 = vmatpush.msra.mxu0 0.0
          %367 = vmatpush.msra.mxu0 0.0
          %368 = vmatpush.msra.mxu0 0.0
          %369 = vmatpush.msra.mxu0 0.0
          %370 = vmatpush.msra.mxu0 0.0
          %371 = vmatpush.msra.mxu0 0.0
          %372 = vmatpush.msra.mxu0 0.0
          %373 = vmatpush.msra.mxu0 0.0
          %374 = vmatpush.msra.mxu0 0.0
          %375 = vmatpush.msra.mxu0 0.0
          %376 = vmatpush.msra.mxu0 %v323
          %377 = vmatmul.f32.gmra.mxu0 %v350
          %v378 = vpop.f32.mrf.mxu0
          %v379 = vadd.f32 %v331, %v378
          %380 = vmatmul.f32.gmra.mxu0 %v353
          %v381 = vpop.f32.mrf.mxu0
          %v382 = vadd.f32 %v336, %v381
          %383 = vmatmul.f32.gmra.mxu0 %v356
          %v384 = vpop.f32.mrf.mxu0
          %v385 = vadd.f32 %v341, %v384
          %386 = vmatmul.f32.gmra.mxu0 %v359
          %v387 = vpop.f32.mrf.mxu0
          %v388 = vadd.f32 %v346, %v387
          %389 = vdwg.mxu0
          %v390 = vmax.f32 %v379, 0.0
          %v391 = vmax.f32 %v382, 0.0
          %v392 = vmax.f32 %v385, 0.0
          %v393 = vmax.f32 %v388, 0.0
          %v394 = vld [vmem:[%s4] sm:$0xff]
          %v395 = vld [vmem:[%s4 + $0x8] sm:$0xff]
          %v396 = vld [vmem:[%s4 + $0x10] sm:$0xff]
          %v397 = vld [vmem:[%s4 + $0x18] sm:$0xff]
          %v398 = vmul.f32 %v390, %v394
          %v399 = vmul.f32 %v391, %v395
          %v400 = vmul.f32 %v392, %v396
          %v401 = vmul.f32 %v393, %v397
          %402 = vst.msk [vmem:[%s253] sm:$0xff] %vm313, %v398
          %403 = vst.msk [vmem:[%s253 + $0x8] sm:$0xff] %vm313, %v399
          %404 = vst.msk [vmem:[%s253 + $0x10] sm:$0xff] %vm313, %v400
          %405 = vst.msk [vmem:[%s253 + $0x18] sm:$0xff] %vm313, %v401
        $region48: #{tpu_custom_call.1} parent=39 // pred_fallthru
          _
        %s406 = sand.u32 %s156, 1
        %s407 = scalar_lea.sflag [#allocation4], %s406
        %s408 = sand.u32 %s156, 1
        %s409 = smul.addr %s408, 32
        %s410 = scalar_lea.vmem [#allocation3], %s409
        // Predicated region
        $region49: #{tpu_custom_call.1} parent=39 // pred_check
          %p411 = pneg %p166
        $region50: #{tpu_custom_call.1} parent=39 // pred_check_branch
          %413 = sbr.rel (%p411) target = $region52
        $region51: #{tpu_custom_call.1} parent=39 // pred_region
          %415 = vsyncadd %s407, 0
          %s416 = smul.addr %s23, 4
          %s417 = smul.addr %s416, 8
          %s418 = scalar_lea.hbm %s5, %s417
          %s419 = sshll.u32 %s410, 4
          %s420 = int_to_ptr.vmem [resolvable:$true] %s419
          %s421 = sshll.u32 %s418, 4
          %s422 = int_to_ptr.hbm [resolvable:$true] %s421
          %427 = dma.vmem_to_hbm [thread:$0]  %s420, 512, %s422, %s407, 128, 128, 8
        $region52: #{tpu_custom_call.1} parent=39 // pred_fallthru
          _
      $region40: #{tpu_custom_call.1} parent=5 // pred_fallthru
        _
      %p428 = scmp.le.s32.totalorder 2, %s14
      // Predicated region
      $region53: #{tpu_custom_call.1} parent=5 // pred_check
        %p429 = pneg %p428
      $region54: #{tpu_custom_call.1} parent=5 // pred_check_branch
        %431 = sbr.rel (%p429) target = $region56
      $region55: #{tpu_custom_call.1} parent=5 // pred_region
        %s432 = ssub.s32 %s14, 2
        // Predicated region
        $region57: #{tpu_custom_call.1} parent=55 // pred_check
          %p433 = pneg %p172
        $region58: #{tpu_custom_call.1} parent=55 // pred_check_branch
          %435 = sbr.rel (%p433) target = $region60
        $region59: #{tpu_custom_call.1} parent=55 // pred_region
          %s436 = sand.u32 %s157, 1
          %s437 = scalar_lea.sflag [#allocation4], %s436
          %s438 = sand.u32 %s157, 1
          %s439 = smul.addr %s438, 32
          %s440 = scalar_lea.vmem [#allocation3], %s439
          %442 = dma.done %s437, 512
        $region60: #{tpu_custom_call.1} parent=55 // pred_fallthru
          _
      $region56: #{tpu_custom_call.1} parent=5 // pred_fallthru
        _
    $region6: #{tpu_custom_call.1} parent=1 // loop_footer
      %s18 = sadd.s32 1, %s14
    $region7: #{tpu_custom_call.1} parent=1 // loop_footer_branch
      %13 = sbr.rel target = $region3
    $region8: #{tpu_custom_call.1} parent=1 // loop_exit
      _
    %443 = vsyncpa [#allocation4], 1
    %s444 = scalar_lea.sflag [#allocation4], 1
    %445 = vsyncpa %s444, 1

</llo_original>
